<compile_context>
chip_gen: v6e
topology: v6e:2x2x1
jax: 0.10.0
libtpu: 0.0.40
codegen_flags: <defaults>
</compile_context>

<pallas_src>
import jax
import jax.numpy as jnp
from jax.experimental import pallas as pl
from jax.experimental.pallas import tpu as pltpu

LANE = 128
SUBLANE = 8


def _round_up(v, m):
    return (v + m - 1) // m * m


def mlp_kernel(x_ref, w1_ref, b1_ref, w2_ref, b2_ref, o_ref):
    # Layer 1: (TB, Kp) @ (Kp, H) with f32 accumulation on the MXU.
    h = jnp.dot(x_ref[...], w1_ref[...], preferred_element_type=jnp.float32)
    # Bias + ReLU in f32 on the VPU (biases are kept f32 even in bf16 mode).
    h = jnp.maximum(h + b1_ref[...], 0.0)
    # Layer 2: (TB, H) @ (H, Op) with f32 accumulation. h is cast back to the
    # matmul dtype (no-op in f32 mode, bf16 in low-precision mode).
    out = jnp.dot(h.astype(w2_ref.dtype), w2_ref[...],
                  preferred_element_type=jnp.float32)
    o_ref[...] = (out + b2_ref[...]).astype(o_ref.dtype)


def mlp_forward(x, w1, b1, w2, b2, *, block_b=512, compute_dtype=jnp.bfloat16):
    """Forward of Linear(784,H) -> ReLU -> Linear(H,10). Returns [B, 10] f32.

    x:  [B, 784]
    w1: [784, H], b1: [1, H]
    w2: [H, 10],  b2: [1, 10]
    """
    B, K = x.shape
    H = w1.shape[1]
    O = w2.shape[1]

    # --- Wrapper-side padding for clean TPU layouts ----------------------
    Kp = _round_up(K, LANE)        # contraction dim -> multiple of 128 (exact, zero-pad)
    Op = _round_up(O, LANE)        # output dim 10 -> 128 for lane-dense stores
    # Batch tile: sublane-aligned, capped at block_b (default 512 keeps the
    # double-buffered x tiles small enough for the default scoped VMEM on
    # v5e/v6e/v7x even in f32).
    TB = _round_up(min(block_b, _round_up(B, SUBLANE)), SUBLANE)
    Bp = _round_up(B, TB)

    x_p = jnp.pad(x, ((0, Bp - B), (0, Kp - K))).astype(compute_dtype)
    w1_p = jnp.pad(w1, ((0, Kp - K), (0, 0))).astype(compute_dtype)
    w2_p = jnp.pad(w2, ((0, 0), (0, Op - O))).astype(compute_dtype)
    b1_p = b1.astype(jnp.float32)
    b2_p = jnp.pad(b2, ((0, 0), (0, Op - O))).astype(jnp.float32)

    grid = (pl.cdiv(Bp, TB),)

    itemsize = jnp.dtype(compute_dtype).itemsize
    bytes_accessed = (x_p.size * itemsize + w1_p.size * itemsize
                      + w2_p.size * itemsize + b1_p.size * 4 + b2_p.size * 4
                      + Bp * Op * 4)
    cost = pl.CostEstimate(
        flops=2 * Bp * (Kp * H + H * Op),
        transcendentals=0,
        bytes_accessed=bytes_accessed,
    )

    out_padded = pl.pallas_call(
        mlp_kernel,
        out_shape=jax.ShapeDtypeStruct((Bp, Op), jnp.float32),
        grid=grid,
        in_specs=[
            # x streams over the batch grid (double-buffered by Pallas).
            pl.BlockSpec((TB, Kp), lambda i: (i, 0)),
            # Weights/biases: constant index_map -> fetched once, VMEM-resident
            # across all grid steps. Block == full array satisfies layout rules.
            pl.BlockSpec((Kp, H), lambda i: (0, 0)),
            pl.BlockSpec((1, H), lambda i: (0, 0)),
            pl.BlockSpec((H, Op), lambda i: (0, 0)),
            pl.BlockSpec((1, Op), lambda i: (0, 0)),
        ],
        out_specs=pl.BlockSpec((TB, Op), lambda i: (i, 0)),
        compiler_params=pltpu.CompilerParams(
            # Batch tiles are independent: shard across both TensorCores on
            # v7x megacore; no-op on v5e/v6e.
            dimension_semantics=("parallel",)),
        cost_estimate=cost,
    )(x_p, w1_p, b1_p, w2_p, b2_p)

    # Strip batch and lane padding.
    return out_padded[:B, :O]


def init_params(key, hidden_size):
    # Deterministic init mimicking PyTorch nn.Linear: U(-1/sqrt(fan_in), 1/sqrt(fan_in))
    k1, k2, k3, k4 = jax.random.split(key, 4)
    in1, out1 = 784, hidden_size
    in2, out2 = hidden_size, 10
    bound1 = 1.0 / jnp.sqrt(in1)
    bound2 = 1.0 / jnp.sqrt(in2)
    w1 = jax.random.uniform(k1, (in1, out1), jnp.float32, -bound1, bound1)
    b1 = jax.random.uniform(k2, (1, out1), jnp.float32, -bound1, bound1)
    w2 = jax.random.uniform(k3, (in2, out2), jnp.float32, -bound2, bound2)
    b2 = jax.random.uniform(k4, (1, out2), jnp.float32, -bound2, bound2)
    return w1, b1, w2, b2


if __name__ == "__main__":
    key = jax.random.PRNGKey(0)
    k_x, k_p = jax.random.split(key)

    B = 2
    hidden_size = 32

    x = jax.random.normal(k_x, (B, 784), jnp.float32)
    w1, b1, w2, b2 = init_params(k_p, hidden_size)

    # --- f32 path: exact check against the reference math ----------------
    out_f32 = jax.block_until_ready(
        mlp_forward(x, w1, b1, w2, b2, compute_dtype=jnp.float32))
    ref_f32 = jnp.maximum(x @ w1 + b1, 0.0) @ w2 + b2
    assert out_f32.shape == (B, 10)
    assert jnp.allclose(out_f32, ref_f32, atol=1e-4, rtol=1e-4)

    # --- bf16 path (default, performance config): same math with bf16 inputs,
    # f32 accumulation, f32 bias/ReLU -----------------------------------------
    out_bf16 = jax.block_until_ready(mlp_forward(x, w1, b1, w2, b2))
    xb = x.astype(jnp.bfloat16)
    w1b = w1.astype(jnp.bfloat16)
    w2b = w2.astype(jnp.bfloat16)
    h_ref = jnp.maximum(
        jnp.dot(xb, w1b, preferred_element_type=jnp.float32) + b1, 0.0)
    ref_bf16 = jnp.dot(h_ref.astype(jnp.bfloat16), w2b,
                       preferred_element_type=jnp.float32) + b2
    assert out_bf16.shape == (B, 10)
    assert jnp.allclose(out_bf16, ref_bf16, atol=1e-2, rtol=1e-2)

    print("KERNEL_OK")
</pallas_src>

<mosaic_0001>
module attributes {stable_mosaic.version = 11 : i64} {
  func.func @mlp_kernel(%arg0: i32, %arg1: memref<8x896xf32, #tpu.memory_space<vmem>>, %arg2: memref<896x32xf32, #tpu.memory_space<vmem>>, %arg3: memref<1x32xf32, #tpu.memory_space<vmem>>, %arg4: memref<32x128xf32, #tpu.memory_space<vmem>>, %arg5: memref<1x128xf32, #tpu.memory_space<vmem>>, %arg6: memref<8x128xf32, #tpu.memory_space<vmem>>) attributes {dimension_semantics = [#tpu.dimension_semantics<parallel>], iteration_bounds = array<i64: 1>, scalar_prefetch = 0 : i64, scratch_operands = 0 : i64, tpu.core_type = #tpu.core_type<tc>, window_params = [{transform_indices = @transform_0, window_bounds = array<i64: 8, 896>}, {pipeline_mode = #tpu.pipeline_mode<synchronous>, transform_indices = @transform_1, window_bounds = array<i64: 896, 32>}, {pipeline_mode = #tpu.pipeline_mode<synchronous>, transform_indices = @transform_2, window_bounds = array<i64: 1, 32>}, {pipeline_mode = #tpu.pipeline_mode<synchronous>, transform_indices = @transform_3, window_bounds = array<i64: 32, 128>}, {pipeline_mode = #tpu.pipeline_mode<synchronous>, transform_indices = @transform_4, window_bounds = array<i64: 1, 128>}, {transform_indices = @transform_5, window_bounds = array<i64: 8, 128>}]} {
    %c0 = arith.constant 0 : index
    %c0_0 = arith.constant 0 : index
    %0 = vector.load %arg1[%c0, %c0_0] : memref<8x896xf32, #tpu.memory_space<vmem>>, vector<8x896xf32>
    %c0_1 = arith.constant 0 : index
    %c0_2 = arith.constant 0 : index
    %1 = vector.load %arg2[%c0_1, %c0_2] : memref<896x32xf32, #tpu.memory_space<vmem>>, vector<896x32xf32>
    %cst = arith.constant dense<0.000000e+00> : vector<8x32xf32>
    %2 = tpu.matmul %0, %1, %cst {dimension_numbers = #tpu.dot_dimension_numbers<[1], [0], [0], [1], [0, 0, 1, 1], [], []>} : vector<8x896xf32>, vector<896x32xf32>, vector<8x32xf32> -> vector<8x32xf32>
    %c0_3 = arith.constant 0 : index
    %c0_4 = arith.constant 0 : index
    %3 = vector.load %arg3[%c0_3, %c0_4] : memref<1x32xf32, #tpu.memory_space<vmem>>, vector<1x32xf32>
    %4 = vector.broadcast %3 : vector<1x32xf32> to vector<8x32xf32>
    %5 = arith.addf %2, %4 : vector<8x32xf32>
    %cst_5 = arith.constant 0.000000e+00 : f32
    %6 = vector.broadcast %cst_5 : f32 to vector<8x32xf32>
    %7 = arith.maximumf %5, %6 : vector<8x32xf32>
    %c0_6 = arith.constant 0 : index
    %c0_7 = arith.constant 0 : index
    %8 = vector.load %arg4[%c0_6, %c0_7] : memref<32x128xf32, #tpu.memory_space<vmem>>, vector<32x128xf32>
    %cst_8 = arith.constant dense<0.000000e+00> : vector<8x128xf32>
    %9 = tpu.matmul %7, %8, %cst_8 {dimension_numbers = #tpu.dot_dimension_numbers<[1], [0], [0], [1], [0, 0, 1, 1], [], []>} : vector<8x32xf32>, vector<32x128xf32>, vector<8x128xf32> -> vector<8x128xf32>
    %c0_9 = arith.constant 0 : index
    %c0_10 = arith.constant 0 : index
    %10 = vector.load %arg5[%c0_9, %c0_10] : memref<1x128xf32, #tpu.memory_space<vmem>>, vector<1x128xf32>
    %11 = vector.broadcast %10 : vector<1x128xf32> to vector<8x128xf32>
    %12 = arith.addf %9, %11 : vector<8x128xf32>
    %c0_11 = arith.constant 0 : index
    %c0_12 = arith.constant 0 : index
    %13 = vector.load %arg6[%c0_11, %c0_12] : memref<8x128xf32, #tpu.memory_space<vmem>>, vector<8x128xf32>
    tpu.vector_store %arg6[%c0_11, %c0_12], %12 {strides = array<i32>} : memref<8x128xf32, #tpu.memory_space<vmem>>, vector<8x128xf32>,
    return
  }
  func.func @transform_0(%arg0: i32) -> (i32, i32) {
    %c0_i32 = arith.constant 0 : i32
    %c0_i32_0 = arith.constant 0 : i32
    return %arg0, %c0_i32 : i32, i32
  }
  func.func @transform_1(%arg0: i32) -> (i32, i32) {
    %c0_i32 = arith.constant 0 : i32
    %c0_i32_0 = arith.constant 0 : i32
    %c0_i32_1 = arith.constant 0 : i32
    return %c0_i32, %c0_i32_0 : i32, i32
  }
  func.func @transform_2(%arg0: i32) -> (i32, i32) {
    %c0_i32 = arith.constant 0 : i32
    %c0_i32_0 = arith.constant 0 : i32
    %c0_i32_1 = arith.constant 0 : i32
    return %c0_i32, %c0_i32_0 : i32, i32
  }
  func.func @transform_3(%arg0: i32) -> (i32, i32) {
    %c0_i32 = arith.constant 0 : i32
    %c0_i32_0 = arith.constant 0 : i32
    %c0_i32_1 = arith.constant 0 : i32
    return %c0_i32, %c0_i32_0 : i32, i32
  }
  func.func @transform_4(%arg0: i32) -> (i32, i32) {
    %c0_i32 = arith.constant 0 : i32
    %c0_i32_0 = arith.constant 0 : i32
    %c0_i32_1 = arith.constant 0 : i32
    return %c0_i32, %c0_i32_0 : i32, i32
  }
  func.func @transform_5(%arg0: i32) -> (i32, i32) {
    %c0_i32 = arith.constant 0 : i32
    %c0_i32_0 = arith.constant 0 : i32
    return %arg0, %c0_i32 : i32, i32
  }
}

</mosaic_0001>

<llo_original>
// kernel: tpu_custom_call.1
$region0: #{tpu_custom_call.1}
  #allocation0 [shape = 'u32[]', space=smem, size = 0x4, offset = 0x4, fixed_abs, tag = 'smem constant byte address 0x4 - core index']
  #allocation1 [shape = 'u32[144,128]{1,0:T(1,128)}', space=vmem, size = 0x12000, scoped, tag = 'internal scratch']
  %s0 = inlined_call_operand.vmem [shape: f32[8,896], index: 0, kind: input, shape index: {}]
  %s1 = inlined_call_operand.vmem [shape: f32[896,32], index: 1, kind: input, shape index: {}]
  %s2 = inlined_call_operand.vmem [shape: f32[1,32], index: 2, kind: input, shape index: {}]
  %s3 = inlined_call_operand.vmem [shape: f32[32,128], index: 3, kind: input, shape index: {}]
  %s4 = inlined_call_operand.vmem [shape: f32[1,128], index: 4, kind: input, shape index: {}]
  %s5 = inlined_call_operand.hbm [shape: f32[8,128], index: 5, kind: output, shape index: {}]
  %s6 = sld [smem:[#allocation0]]
  $region30: #{tpu_custom_call.1} parent=0
    _
  %s8 = ssub.s32 1, %s6
  %s9 = scalar_select 0, %s8, %s6
  $region1: #{tpu_custom_call.1} parent=0
    #allocation2 [shape = 'u8[4096]{0}', space=vmem, size = 0x1000, scoped, tag = 'output window, operand 0, single buffered']
    #allocation3 [shape = 's32[1]{0}', space=sflag, size = 0x4, scoped, tag = 'scoped memory for tpu_custom_call.1']
    %10 = vsyncpa [#allocation3], 0
    // Predicated region
    $region2: #{tpu_custom_call.1} parent=1 // pred_check
      _
    $region3: #{tpu_custom_call.1} parent=1 // pred_check_branch
      %12 = sbr.rel (0) target = $region5
    $region4: #{tpu_custom_call.1} parent=1 // pred_region
      _
    $region5: #{tpu_custom_call.1} parent=1 // pred_fallthru
      _
    // Predicated region
    $region6: #{tpu_custom_call.1} parent=1 // pred_check
      _
    $region7: #{tpu_custom_call.1} parent=1 // pred_check_branch
      %14 = sbr.rel (0) target = $region9
    $region8: #{tpu_custom_call.1} parent=1 // pred_region
      _
    $region9: #{tpu_custom_call.1} parent=1 // pred_fallthru
      _
    // Predicated region
    $region10: #{tpu_custom_call.1} parent=1 // pred_check
      _
    $region11: #{tpu_custom_call.1} parent=1 // pred_check_branch
      %16 = sbr.rel (0) target = $region13
    $region12: #{tpu_custom_call.1} parent=1 // pred_region
      _
    $region13: #{tpu_custom_call.1} parent=1 // pred_fallthru
      _
    // Predicated region
    $region14: #{tpu_custom_call.1} parent=1 // pred_check
      _
    $region15: #{tpu_custom_call.1} parent=1 // pred_check_branch
      %18 = sbr.rel (0) target = $region17
    $region16: #{tpu_custom_call.1} parent=1 // pred_region
      _
    $region17: #{tpu_custom_call.1} parent=1 // pred_fallthru
      _
    // Predicated region
    $region18: #{tpu_custom_call.1} parent=1 // pred_check
      _
    $region19: #{tpu_custom_call.1} parent=1 // pred_check_branch
      %20 = sbr.rel (0) target = $region21
    $region20: #{tpu_custom_call.1} parent=1 // pred_region
      _
    $region21: #{tpu_custom_call.1} parent=1 // pred_fallthru
      _
    %v21 = vld [vmem:[%s0] sm:$0xff]
    %v22 = vld [vmem:[%s0 + $0x8] sm:$0xff]
    %v23 = vld [vmem:[%s0 + $0x10] sm:$0xff]
    %v24 = vld [vmem:[%s0 + $0x18] sm:$0xff]
    %v25 = vld [vmem:[%s0 + $0x20] sm:$0xff]
    %v26 = vld [vmem:[%s0 + $0x28] sm:$0xff]
    %v27 = vld [vmem:[%s0 + $0x30] sm:$0xff]
    %v28 = vld [vmem:[%s1] sm:$0xff]
    %v29 = vld [vmem:[%s1 + $0x8] sm:$0xff]
    %v30 = vld [vmem:[%s1 + $0x10] sm:$0xff]
    %v31 = vld [vmem:[%s1 + $0x18] sm:$0xff]
    %v32 = vld [vmem:[%s1 + $0x20] sm:$0xff]
    %v33 = vld [vmem:[%s1 + $0x28] sm:$0xff]
    %v34 = vld [vmem:[%s1 + $0x30] sm:$0xff]
    %v35 = vld [vmem:[%s1 + $0x38] sm:$0xff]
    %v36 = vld [vmem:[%s1 + $0x40] sm:$0xff]
    %v37 = vld [vmem:[%s1 + $0x48] sm:$0xff]
    %v38 = vld [vmem:[%s1 + $0x50] sm:$0xff]
    %v39 = vld [vmem:[%s1 + $0x58] sm:$0xff]
    %v40 = vld [vmem:[%s1 + $0x60] sm:$0xff]
    %v41 = vld [vmem:[%s1 + $0x68] sm:$0xff]
    %v42 = vld [vmem:[%s1 + $0x70] sm:$0xff]
    %v43 = vld [vmem:[%s1 + $0x78] sm:$0xff]
    %v44 = vld [vmem:[%s1 + $0x80] sm:$0xff]
    %v45 = vld [vmem:[%s1 + $0x88] sm:$0xff]
    %v46 = vld [vmem:[%s1 + $0x90] sm:$0xff]
    %v47 = vld [vmem:[%s1 + $0x98] sm:$0xff]
    %v48 = vld [vmem:[%s1 + $0xa0] sm:$0xff]
    %v49 = vld [vmem:[%s1 + $0xa8] sm:$0xff]
    %v50 = vld [vmem:[%s1 + $0xb0] sm:$0xff]
    %v51 = vld [vmem:[%s1 + $0xb8] sm:$0xff]
    %v52 = vld [vmem:[%s1 + $0xc0] sm:$0xff]
    %v53 = vld [vmem:[%s1 + $0xc8] sm:$0xff]
    %v54 = vld [vmem:[%s1 + $0xd0] sm:$0xff]
    %v55 = vld [vmem:[%s1 + $0xd8] sm:$0xff]
    %v56 = vld [vmem:[%s1 + $0xe0] sm:$0xff]
    %v57 = vld [vmem:[%s1 + $0xe8] sm:$0xff]
    %v58 = vld [vmem:[%s1 + $0xf0] sm:$0xff]
    %v59 = vld [vmem:[%s1 + $0xf8] sm:$0xff]
    %v60 = vld [vmem:[%s1 + $0x100] sm:$0xff]
    %v61 = vld [vmem:[%s1 + $0x108] sm:$0xff]
    %v62 = vld [vmem:[%s1 + $0x110] sm:$0xff]
    %v63 = vld [vmem:[%s1 + $0x118] sm:$0xff]
    %v64 = vld [vmem:[%s1 + $0x120] sm:$0xff]
    %v65 = vld [vmem:[%s1 + $0x128] sm:$0xff]
    %v66 = vld [vmem:[%s1 + $0x130] sm:$0xff]
    %v67 = vld [vmem:[%s1 + $0x138] sm:$0xff]
    %v68 = vld [vmem:[%s1 + $0x140] sm:$0xff]
    %v69 = vld [vmem:[%s1 + $0x148] sm:$0xff]
    %v70 = vld [vmem:[%s1 + $0x150] sm:$0xff]
    %v71 = vld [vmem:[%s1 + $0x158] sm:$0xff]
    %v72 = vld [vmem:[%s1 + $0x160] sm:$0xff]
    %v73 = vld [vmem:[%s1 + $0x168] sm:$0xff]
    %v74 = vld [vmem:[%s1 + $0x170] sm:$0xff]
    %v75 = vld [vmem:[%s1 + $0x178] sm:$0xff]
    %v76 = vld [vmem:[%s1 + $0x180] sm:$0xff]
    %v77 = vld [vmem:[%s1 + $0x188] sm:$0xff]
    %v78 = vld [vmem:[%s1 + $0x190] sm:$0xff]
    %v79 = vld [vmem:[%s1 + $0x198] sm:$0xff]
    %v80 = vld [vmem:[%s1 + $0x1a0] sm:$0xff]
    %v81 = vld [vmem:[%s1 + $0x1a8] sm:$0xff]
    %v82 = vld [vmem:[%s1 + $0x1b0] sm:$0xff]
    %v83 = vld [vmem:[%s1 + $0x1b8] sm:$0xff]
    %v84 = vld [vmem:[%s1 + $0x1c0] sm:$0xff]
    %v85 = vld [vmem:[%s1 + $0x1c8] sm:$0xff]
    %v86 = vld [vmem:[%s1 + $0x1d0] sm:$0xff]
    %v87 = vld [vmem:[%s1 + $0x1d8] sm:$0xff]
    %v88 = vld [vmem:[%s1 + $0x1e0] sm:$0xff]
    %v89 = vld [vmem:[%s1 + $0x1e8] sm:$0xff]
    %v90 = vld [vmem:[%s1 + $0x1f0] sm:$0xff]
    %v91 = vld [vmem:[%s1 + $0x1f8] sm:$0xff]
    %v92 = vld [vmem:[%s1 + $0x200] sm:$0xff]
    %v93 = vld [vmem:[%s1 + $0x208] sm:$0xff]
    %v94 = vld [vmem:[%s1 + $0x210] sm:$0xff]
    %v95 = vld [vmem:[%s1 + $0x218] sm:$0xff]
    %v96 = vld [vmem:[%s1 + $0x220] sm:$0xff]
    %v97 = vld [vmem:[%s1 + $0x228] sm:$0xff]
    %v98 = vld [vmem:[%s1 + $0x230] sm:$0xff]
    %v99 = vld [vmem:[%s1 + $0x238] sm:$0xff]
    %v100 = vld [vmem:[%s1 + $0x240] sm:$0xff]
    %v101 = vld [vmem:[%s1 + $0x248] sm:$0xff]
    %v102 = vld [vmem:[%s1 + $0x250] sm:$0xff]
    %v103 = vld [vmem:[%s1 + $0x258] sm:$0xff]
    %v104 = vld [vmem:[%s1 + $0x260] sm:$0xff]
    %v105 = vld [vmem:[%s1 + $0x268] sm:$0xff]
    %v106 = vld [vmem:[%s1 + $0x270] sm:$0xff]
    %v107 = vld [vmem:[%s1 + $0x278] sm:$0xff]
    %v108 = vld [vmem:[%s1 + $0x280] sm:$0xff]
    %v109 = vld [vmem:[%s1 + $0x288] sm:$0xff]
    %v110 = vld [vmem:[%s1 + $0x290] sm:$0xff]
    %v111 = vld [vmem:[%s1 + $0x298] sm:$0xff]
    %v112 = vld [vmem:[%s1 + $0x2a0] sm:$0xff]
    %v113 = vld [vmem:[%s1 + $0x2a8] sm:$0xff]
    %v114 = vld [vmem:[%s1 + $0x2b0] sm:$0xff]
    %v115 = vld [vmem:[%s1 + $0x2b8] sm:$0xff]
    %v116 = vld [vmem:[%s1 + $0x2c0] sm:$0xff]
    %v117 = vld [vmem:[%s1 + $0x2c8] sm:$0xff]
    %v118 = vld [vmem:[%s1 + $0x2d0] sm:$0xff]
    %v119 = vld [vmem:[%s1 + $0x2d8] sm:$0xff]
    %v120 = vld [vmem:[%s1 + $0x2e0] sm:$0xff]
    %v121 = vld [vmem:[%s1 + $0x2e8] sm:$0xff]
    %v122 = vld [vmem:[%s1 + $0x2f0] sm:$0xff]
    %v123 = vld [vmem:[%s1 + $0x2f8] sm:$0xff]
    %v124 = vld [vmem:[%s1 + $0x300] sm:$0xff]
    %v125 = vld [vmem:[%s1 + $0x308] sm:$0xff]
    %v126 = vld [vmem:[%s1 + $0x310] sm:$0xff]
    %v127 = vld [vmem:[%s1 + $0x318] sm:$0xff]
    %v128 = vld [vmem:[%s1 + $0x320] sm:$0xff]
    %v129 = vld [vmem:[%s1 + $0x328] sm:$0xff]
    %v130 = vld [vmem:[%s1 + $0x330] sm:$0xff]
    %v131 = vld [vmem:[%s1 + $0x338] sm:$0xff]
    %v132 = vld [vmem:[%s1 + $0x340] sm:$0xff]
    %v133 = vld [vmem:[%s1 + $0x348] sm:$0xff]
    %v134 = vld [vmem:[%s1 + $0x350] sm:$0xff]
    %v135 = vld [vmem:[%s1 + $0x358] sm:$0xff]
    %v136 = vld [vmem:[%s1 + $0x360] sm:$0xff]
    %v137 = vld [vmem:[%s1 + $0x368] sm:$0xff]
    %v138 = vld [vmem:[%s1 + $0x370] sm:$0xff]
    %v139 = vld [vmem:[%s1 + $0x378] sm:$0xff]
    %v140 = vld [vmem:[%s2] sm:$0x1]
    %v142 = vlaneseq
    %v143 = vshrl.u32 %v142, 7
    %v144 = vsub.s32 0, %v143
    %v145 = vrot.slane %v140, %v144
    %147 = vmatprep.subr.mxu0 0.0
    %148 = vmatpush1.msra.mxu0 %v43
    %149 = vmatprep.subr.mxu0 0.0
    %150 = vmatpush1.msra.mxu0 %v42
    %151 = vmatprep.subr.mxu0 0.0
    %152 = vmatpush1.msra.mxu0 %v41
    %153 = vmatprep.subr.mxu0 0.0
    %154 = vmatpush1.msra.mxu0 %v40
    %155 = vmatprep.subr.mxu0 0.0
    %156 = vmatpush1.msra.mxu0 %v39
    %157 = vmatprep.subr.mxu0 0.0
    %158 = vmatpush1.msra.mxu0 %v38
    %159 = vmatprep.subr.mxu0 0.0
    %160 = vmatpush1.msra.mxu0 %v37
    %161 = vmatprep.subr.mxu0 0.0
    %162 = vmatpush1.msra.mxu0 %v36
    %163 = vmatprep.subr.mxu0 0.0
    %164 = vmatpush1.msra.mxu0 %v35
    %165 = vmatprep.subr.mxu0 0.0
    %166 = vmatpush1.msra.mxu0 %v34
    %167 = vmatprep.subr.mxu0 0.0
    %168 = vmatpush1.msra.mxu0 %v33
    %169 = vmatprep.subr.mxu0 0.0
    %170 = vmatpush1.msra.mxu0 %v32
    %171 = vmatprep.subr.mxu0 0.0
    %172 = vmatpush1.msra.mxu0 %v31
    %173 = vmatprep.subr.mxu0 0.0
    %174 = vmatpush1.msra.mxu0 %v30
    %175 = vmatprep.subr.mxu0 0.0
    %176 = vmatpush1.msra.mxu0 %v29
    %177 = vmatprep.subr.mxu0 0.0
    %178 = vmatpush1.msra.mxu0 %v28
    %179 = vmatprep.subr.mxu0 0.0
    %180 = vmatpush2.msra.mxu0 %v59
    %181 = vmatprep.subr.mxu0 0.0
    %182 = vmatpush2.msra.mxu0 %v58
    %183 = vmatprep.subr.mxu0 0.0
    %184 = vmatpush2.msra.mxu0 %v57
    %185 = vmatprep.subr.mxu0 0.0
    %186 = vmatpush2.msra.mxu0 %v56
    %187 = vmatprep.subr.mxu0 0.0
    %188 = vmatpush2.msra.mxu0 %v55
    %189 = vmatprep.subr.mxu0 0.0
    %190 = vmatpush2.msra.mxu0 %v54
    %191 = vmatprep.subr.mxu0 0.0
    %192 = vmatpush2.msra.mxu0 %v53
    %193 = vmatprep.subr.mxu0 0.0
    %194 = vmatpush2.msra.mxu0 %v52
    %195 = vmatprep.subr.mxu0 0.0
    %196 = vmatpush2.msra.mxu0 %v51
    %197 = vmatprep.subr.mxu0 0.0
    %198 = vmatpush2.msra.mxu0 %v50
    %199 = vmatprep.subr.mxu0 0.0
    %200 = vmatpush2.msra.mxu0 %v49
    %201 = vmatprep.subr.mxu0 0.0
    %202 = vmatpush2.msra.mxu0 %v48
    %203 = vmatprep.subr.mxu0 0.0
    %204 = vmatpush2.msra.mxu0 %v47
    %205 = vmatprep.subr.mxu0 0.0
    %206 = vmatpush2.msra.mxu0 %v46
    %207 = vmatprep.subr.mxu0 0.0
    %208 = vmatpush2.msra.mxu0 %v45
    %209 = vmatprep.subr.mxu0 0.0
    %210 = vmatpush2.msra.mxu0 %v44
    %211 = vmatprep.mubr.f32.mxu0 %v22
    %212 = vmatmul.mubr.f32.gmra.mxu0 %v21
    %v213 = vpop.f32.mrf.mxu0
    %v214 = vadd.f32 %v145, %v213
    %v215 = vpop.f32.mrf.mxu0
    %216 = vdwg.mxu0
    %217 = vmatprep.subr.mxu0 0.0
    %218 = vmatpush1.msra.mxu0 %v75
    %219 = vmatprep.subr.mxu0 0.0
    %220 = vmatpush1.msra.mxu0 %v74
    %221 = vmatprep.subr.mxu0 0.0
    %222 = vmatpush1.msra.mxu0 %v73
    %223 = vmatprep.subr.mxu0 0.0
    %224 = vmatpush1.msra.mxu0 %v72
    %225 = vmatprep.subr.mxu0 0.0
    %226 = vmatpush1.msra.mxu0 %v71
    %227 = vmatprep.subr.mxu0 0.0
    %228 = vmatpush1.msra.mxu0 %v70
    %229 = vmatprep.subr.mxu0 0.0
    %230 = vmatpush1.msra.mxu0 %v69
    %231 = vmatprep.subr.mxu0 0.0
    %232 = vmatpush1.msra.mxu0 %v68
    %233 = vmatprep.subr.mxu0 0.0
    %234 = vmatpush1.msra.mxu0 %v67
    %235 = vmatprep.subr.mxu0 0.0
    %236 = vmatpush1.msra.mxu0 %v66
    %237 = vmatprep.subr.mxu0 0.0
    %238 = vmatpush1.msra.mxu0 %v65
    %239 = vmatprep.subr.mxu0 0.0
    %240 = vmatpush1.msra.mxu0 %v64
    %241 = vmatprep.subr.mxu0 0.0
    %242 = vmatpush1.msra.mxu0 %v63
    %243 = vmatprep.subr.mxu0 0.0
    %244 = vmatpush1.msra.mxu0 %v62
    %245 = vmatprep.subr.mxu0 0.0
    %246 = vmatpush1.msra.mxu0 %v61
    %247 = vmatprep.subr.mxu0 0.0
    %248 = vmatpush1.msra.mxu0 %v60
    %249 = vmatprep.subr.mxu0 0.0
    %250 = vmatpush2.msra.mxu0 %v91
    %251 = vmatprep.subr.mxu0 0.0
    %252 = vmatpush2.msra.mxu0 %v90
    %253 = vmatprep.subr.mxu0 0.0
    %254 = vmatpush2.msra.mxu0 %v89
    %255 = vmatprep.subr.mxu0 0.0
    %256 = vmatpush2.msra.mxu0 %v88
    %257 = vmatprep.subr.mxu0 0.0
    %258 = vmatpush2.msra.mxu0 %v87
    %259 = vmatprep.subr.mxu0 0.0
    %260 = vmatpush2.msra.mxu0 %v86
    %261 = vmatprep.subr.mxu0 0.0
    %262 = vmatpush2.msra.mxu0 %v85
    %263 = vmatprep.subr.mxu0 0.0
    %264 = vmatpush2.msra.mxu0 %v84
    %265 = vmatprep.subr.mxu0 0.0
    %266 = vmatpush2.msra.mxu0 %v83
    %267 = vmatprep.subr.mxu0 0.0
    %268 = vmatpush2.msra.mxu0 %v82
    %269 = vmatprep.subr.mxu0 0.0
    %270 = vmatpush2.msra.mxu0 %v81
    %271 = vmatprep.subr.mxu0 0.0
    %272 = vmatpush2.msra.mxu0 %v80
    %273 = vmatprep.subr.mxu0 0.0
    %274 = vmatpush2.msra.mxu0 %v79
    %275 = vmatprep.subr.mxu0 0.0
    %276 = vmatpush2.msra.mxu0 %v78
    %277 = vmatprep.subr.mxu0 0.0
    %278 = vmatpush2.msra.mxu0 %v77
    %279 = vmatprep.subr.mxu0 0.0
    %280 = vmatpush2.msra.mxu0 %v76
    %281 = vmatprep.mubr.f32.mxu0 %v24
    %282 = vmatmul.mubr.f32.gmra.mxu0 %v23
    %v283 = vpop.f32.mrf.mxu0
    %v284 = vadd.f32 %v214, %v283
    %v285 = vpop.f32.mrf.mxu0
    %286 = vdwg.mxu0
    %287 = vmatprep.subr.mxu0 0.0
    %288 = vmatpush1.msra.mxu0 %v107
    %289 = vmatprep.subr.mxu0 0.0
    %290 = vmatpush1.msra.mxu0 %v106
    %291 = vmatprep.subr.mxu0 0.0
    %292 = vmatpush1.msra.mxu0 %v105
    %293 = vmatprep.subr.mxu0 0.0
    %294 = vmatpush1.msra.mxu0 %v104
    %295 = vmatprep.subr.mxu0 0.0
    %296 = vmatpush1.msra.mxu0 %v103
    %297 = vmatprep.subr.mxu0 0.0
    %298 = vmatpush1.msra.mxu0 %v102
    %299 = vmatprep.subr.mxu0 0.0
    %300 = vmatpush1.msra.mxu0 %v101
    %301 = vmatprep.subr.mxu0 0.0
    %302 = vmatpush1.msra.mxu0 %v100
    %303 = vmatprep.subr.mxu0 0.0
    %304 = vmatpush1.msra.mxu0 %v99
    %305 = vmatprep.subr.mxu0 0.0
    %306 = vmatpush1.msra.mxu0 %v98
    %307 = vmatprep.subr.mxu0 0.0
    %308 = vmatpush1.msra.mxu0 %v97
    %309 = vmatprep.subr.mxu0 0.0
    %310 = vmatpush1.msra.mxu0 %v96
    %311 = vmatprep.subr.mxu0 0.0
    %312 = vmatpush1.msra.mxu0 %v95
    %313 = vmatprep.subr.mxu0 0.0
    %314 = vmatpush1.msra.mxu0 %v94
    %315 = vmatprep.subr.mxu0 0.0
    %316 = vmatpush1.msra.mxu0 %v93
    %317 = vmatprep.subr.mxu0 0.0
    %318 = vmatpush1.msra.mxu0 %v92
    %319 = vmatprep.subr.mxu0 0.0
    %320 = vmatpush2.msra.mxu0 %v123
    %321 = vmatprep.subr.mxu0 0.0
    %322 = vmatpush2.msra.mxu0 %v122
    %323 = vmatprep.subr.mxu0 0.0
    %324 = vmatpush2.msra.mxu0 %v121
    %325 = vmatprep.subr.mxu0 0.0
    %326 = vmatpush2.msra.mxu0 %v120
    %327 = vmatprep.subr.mxu0 0.0
    %328 = vmatpush2.msra.mxu0 %v119
    %329 = vmatprep.subr.mxu0 0.0
    %330 = vmatpush2.msra.mxu0 %v118
    %331 = vmatprep.subr.mxu0 0.0
    %332 = vmatpush2.msra.mxu0 %v117
    %333 = vmatprep.subr.mxu0 0.0
    %334 = vmatpush2.msra.mxu0 %v116
    %335 = vmatprep.subr.mxu0 0.0
    %336 = vmatpush2.msra.mxu0 %v115
    %337 = vmatprep.subr.mxu0 0.0
    %338 = vmatpush2.msra.mxu0 %v114
    %339 = vmatprep.subr.mxu0 0.0
    %340 = vmatpush2.msra.mxu0 %v113
    %341 = vmatprep.subr.mxu0 0.0
    %342 = vmatpush2.msra.mxu0 %v112
    %343 = vmatprep.subr.mxu0 0.0
    %344 = vmatpush2.msra.mxu0 %v111
    %345 = vmatprep.subr.mxu0 0.0
    %346 = vmatpush2.msra.mxu0 %v110
    %347 = vmatprep.subr.mxu0 0.0
    %348 = vmatpush2.msra.mxu0 %v109
    %349 = vmatprep.subr.mxu0 0.0
    %350 = vmatpush2.msra.mxu0 %v108
    %351 = vmatprep.mubr.f32.mxu0 %v26
    %352 = vmatmul.mubr.f32.gmra.mxu0 %v25
    %v353 = vpop.f32.mrf.mxu0
    %v354 = vadd.f32 %v284, %v353
    %v355 = vpop.f32.mrf.mxu0
    %356 = vdwg.mxu0
    %357 = vmatprep.subr.mxu0 0.0
    %358 = vmatpush1.msra.mxu0 %v139
    %359 = vmatprep.subr.mxu0 0.0
    %360 = vmatpush1.msra.mxu0 %v138
    %361 = vmatprep.subr.mxu0 0.0
    %362 = vmatpush1.msra.mxu0 %v137
    %363 = vmatprep.subr.mxu0 0.0
    %364 = vmatpush1.msra.mxu0 %v136
    %365 = vmatprep.subr.mxu0 0.0
    %366 = vmatpush1.msra.mxu0 %v135
    %367 = vmatprep.subr.mxu0 0.0
    %368 = vmatpush1.msra.mxu0 %v134
    %369 = vmatprep.subr.mxu0 0.0
    %370 = vmatpush1.msra.mxu0 %v133
    %371 = vmatprep.subr.mxu0 0.0
    %372 = vmatpush1.msra.mxu0 %v132
    %373 = vmatprep.subr.mxu0 0.0
    %374 = vmatpush1.msra.mxu0 %v131
    %375 = vmatprep.subr.mxu0 0.0
    %376 = vmatpush1.msra.mxu0 %v130
    %377 = vmatprep.subr.mxu0 0.0
    %378 = vmatpush1.msra.mxu0 %v129
    %379 = vmatprep.subr.mxu0 0.0
    %380 = vmatpush1.msra.mxu0 %v128
    %381 = vmatprep.subr.mxu0 0.0
    %382 = vmatpush1.msra.mxu0 %v127
    %383 = vmatprep.subr.mxu0 0.0
    %384 = vmatpush1.msra.mxu0 %v126
    %385 = vmatprep.subr.mxu0 0.0
    %386 = vmatpush1.msra.mxu0 %v125
    %387 = vmatprep.subr.mxu0 0.0
    %388 = vmatpush1.msra.mxu0 %v124
    %389 = vmatprep.subr.mxu0 0.0
    %390 = vmatpush2.msra.mxu0 0.0
    %391 = vmatprep.subr.mxu0 0.0
    %392 = vmatpush2.msra.mxu0 0.0
    %393 = vmatprep.subr.mxu0 0.0
    %394 = vmatpush2.msra.mxu0 0.0
    %395 = vmatprep.subr.mxu0 0.0
    %396 = vmatpush2.msra.mxu0 0.0
    %397 = vmatprep.subr.mxu0 0.0
    %398 = vmatpush2.msra.mxu0 0.0
    %399 = vmatprep.subr.mxu0 0.0
    %400 = vmatpush2.msra.mxu0 0.0
    %401 = vmatprep.subr.mxu0 0.0
    %402 = vmatpush2.msra.mxu0 0.0
    %403 = vmatprep.subr.mxu0 0.0
    %404 = vmatpush2.msra.mxu0 0.0
    %405 = vmatprep.subr.mxu0 0.0
    %406 = vmatpush2.msra.mxu0 0.0
    %407 = vmatprep.subr.mxu0 0.0
    %408 = vmatpush2.msra.mxu0 0.0
    %409 = vmatprep.subr.mxu0 0.0
    %410 = vmatpush2.msra.mxu0 0.0
    %411 = vmatprep.subr.mxu0 0.0
    %412 = vmatpush2.msra.mxu0 0.0
    %413 = vmatprep.subr.mxu0 0.0
    %414 = vmatpush2.msra.mxu0 0.0
    %415 = vmatprep.subr.mxu0 0.0
    %416 = vmatpush2.msra.mxu0 0.0
    %417 = vmatprep.subr.mxu0 0.0
    %418 = vmatpush2.msra.mxu0 0.0
    %419 = vmatprep.subr.mxu0 0.0
    %420 = vmatpush2.msra.mxu0 0.0
    %421 = vmatprep.mubr.f32.mxu0 0.0
    %422 = vmatmul.mubr.f32.gmra.mxu0 %v27
    %v423 = vpop.f32.mrf.mxu0
    %v424 = vadd.f32 %v354, %v423
    %v425 = vpop.f32.mrf.mxu0
    %426 = vdwg.mxu0
    %v427 = vmax.f32 %v424, 0.0
    %v428 = vld [vmem:[%s3] sm:$0xff]
    %v429 = vld [vmem:[%s3 + $0x8] sm:$0xff]
    %v430 = vld [vmem:[%s3 + $0x10] sm:$0xff]
    %v431 = vld [vmem:[%s3 + $0x18] sm:$0xff]
    %v432 = vld [vmem:[%s4] sm:$0x1]
    %v434 = vlaneseq
    %v435 = vshrl.u32 %v434, 7
    %v436 = vsub.s32 0, %v435
    %v437 = vrot.slane %v432, %v436
    %vm439 = vcmask 261120
    %v441 = vsel %vm439, %v427, 0
    %443 = vmatprep.subr.mxu0 0.0
    %444 = vmatpush1.msra.mxu0 0.0
    %445 = vmatprep.subr.mxu0 0.0
    %446 = vmatpush1.msra.mxu0 0.0
    %447 = vmatprep.subr.mxu0 0.0
    %448 = vmatpush1.msra.mxu0 0.0
    %449 = vmatprep.subr.mxu0 0.0
    %450 = vmatpush1.msra.mxu0 0.0
    %451 = vmatprep.subr.mxu0 0.0
    %452 = vmatpush1.msra.mxu0 0.0
    %453 = vmatprep.subr.mxu0 0.0
    %454 = vmatpush1.msra.mxu0 0.0
    %455 = vmatprep.subr.mxu0 0.0
    %456 = vmatpush1.msra.mxu0 0.0
    %457 = vmatprep.subr.mxu0 0.0
    %458 = vmatpush1.msra.mxu0 0.0
    %459 = vmatprep.subr.mxu0 0.0
    %460 = vmatpush1.msra.mxu0 0.0
    %461 = vmatprep.subr.mxu0 0.0
    %462 = vmatpush1.msra.mxu0 0.0
    %463 = vmatprep.subr.mxu0 0.0
    %464 = vmatpush1.msra.mxu0 0.0
    %465 = vmatprep.subr.mxu0 0.0
    %466 = vmatpush1.msra.mxu0 0.0
    %467 = vmatprep.subr.mxu0 0.0
    %468 = vmatpush1.msra.mxu0 %v431
    %469 = vmatprep.subr.mxu0 0.0
    %470 = vmatpush1.msra.mxu0 %v430
    %471 = vmatprep.subr.mxu0 0.0
    %472 = vmatpush1.msra.mxu0 %v429
    %473 = vmatprep.subr.mxu0 0.0
    %474 = vmatpush1.msra.mxu0 %v428
    %475 = vmatprep.subr.mxu0 0.0
    %476 = vmatpush2.msra.mxu0 0.0
    %477 = vmatprep.subr.mxu0 0.0
    %478 = vmatpush2.msra.mxu0 0.0
    %479 = vmatprep.subr.mxu0 0.0
    %480 = vmatpush2.msra.mxu0 0.0
    %481 = vmatprep.subr.mxu0 0.0
    %482 = vmatpush2.msra.mxu0 0.0
    %483 = vmatprep.subr.mxu0 0.0
    %484 = vmatpush2.msra.mxu0 0.0
    %485 = vmatprep.subr.mxu0 0.0
    %486 = vmatpush2.msra.mxu0 0.0
    %487 = vmatprep.subr.mxu0 0.0
    %488 = vmatpush2.msra.mxu0 0.0
    %489 = vmatprep.subr.mxu0 0.0
    %490 = vmatpush2.msra.mxu0 0.0
    %491 = vmatprep.subr.mxu0 0.0
    %492 = vmatpush2.msra.mxu0 0.0
    %493 = vmatprep.subr.mxu0 0.0
    %494 = vmatpush2.msra.mxu0 0.0
    %495 = vmatprep.subr.mxu0 0.0
    %496 = vmatpush2.msra.mxu0 0.0
    %497 = vmatprep.subr.mxu0 0.0
    %498 = vmatpush2.msra.mxu0 0.0
    %499 = vmatprep.subr.mxu0 0.0
    %500 = vmatpush2.msra.mxu0 0.0
    %501 = vmatprep.subr.mxu0 0.0
    %502 = vmatpush2.msra.mxu0 0.0
    %503 = vmatprep.subr.mxu0 0.0
    %504 = vmatpush2.msra.mxu0 0.0
    %505 = vmatprep.subr.mxu0 0.0
    %506 = vmatpush2.msra.mxu0 0.0
    %507 = vmatprep.mubr.f32.mxu0 0.0
    %508 = vmatmul.mubr.f32.gmra.mxu0 %v441
    %v509 = vpop.f32.mrf.mxu0
    %v510 = vadd.f32 %v437, %v509
    %v511 = vpop.f32.mrf.mxu0
    %512 = vdwg.mxu0
    %513 = vst [vmem:[#allocation2] sm:$0xff] %v510
    // Predicated region
    $region22: #{tpu_custom_call.1} parent=1 // pred_check
      _
    $region23: #{tpu_custom_call.1} parent=1 // pred_check_branch
      %515 = sbr.rel (0) target = $region25
    $region24: #{tpu_custom_call.1} parent=1 // pred_region
      %s517 = ssub.s32 128, 128
      %518 = vsyncadd [#allocation3], %s517
      %s520 = sshll.u32 [#allocation2], 4
      %s521 = int_to_ptr.vmem [resolvable:$true] %s520
      %523 = dma.vmem_to_hbm [thread:$0]  %s521, 128, %s5, [#allocation3]
    $region25: #{tpu_custom_call.1} parent=1 // pred_fallthru
      _
    // Predicated region
    $region26: #{tpu_custom_call.1} parent=1 // pred_check
      _
    $region27: #{tpu_custom_call.1} parent=1 // pred_check_branch
      %525 = sbr.rel (0) target = $region29
    $region28: #{tpu_custom_call.1} parent=1 // pred_region
      %526 = dma.done [#allocation3], 128
    $region29: #{tpu_custom_call.1} parent=1 // pred_fallthru
      _
    %527 = vsyncpa [#allocation3], 1

</llo_original>
